<compile_context>
chip_gen: v6e
topology: v6e:2x2x1
jax: 0.10.0
libtpu: 0.0.40
codegen_flags: <defaults>
</compile_context>

<pallas_src>
import jax
import jax.numpy as jnp
from jax.experimental import pallas as pl
from jax.experimental.pallas import tpu as pltpu

TEXT_DIM = 32
VISUAL_DIM = 16
EPS = 1e-6          # eps used in the MAG alpha computation
LN_EPS = 1e-5       # torch.nn.LayerNorm default eps

MAX_BATCH_BLOCK = 1024   # rows per grid step; ~5 MiB of pipelined buffers at 1024


def _round_up(x, m):
    return ((x + m - 1) // m) * m


def _choose_block(b, block_cap):
    """Rows per grid step: big blocks (amortize ~0.35us/step, hit HBM roofline),
    but aim for >= ~4 grid steps when the batch allows (two v7x TCs + pipeline
    depth), and prefer a divisor of B (multiple of 8) to avoid padding."""
    target = max(8, _round_up(pl.cdiv(b, 4), 8))
    bb = max(8, min(block_cap, target))
    if b % 8 == 0:
        floor = max(8, ((bb * 3) // 4) // 8 * 8)   # never shrink blocks > ~25%
        cand = bb
        while cand >= floor and b % cand != 0:
            cand -= 8
        if cand >= floor and b % cand == 0:
            bb = cand
    b_pad = _round_up(b, bb)
    return bb, b_pad


# --------------------------------------------------------------------------- #
# Kernel
# --------------------------------------------------------------------------- #
def _mag_wide_kernel(beta_ref, vis_ref, txt_ref, wvis_ref, wtxt_ref,
                     misc_ref, sseg2_ref, bcast2_ref, out_ref):
    """One batch block per grid step; everything in the flattened 'wide' layout."""
    n_wide = out_ref.shape[-1]              # S_t * T   (e.g. 256)
    s_t = bcast2_ref.shape[0] // 2          # S_t
    inv_t = 1.0 / (n_wide // s_t)           # 1 / T

    beta = beta_ref[0, 0]                   # SMEM scalar
    txt = txt_ref[...]                      # (Bb, S_t*T) f32
    w_vis = wvis_ref[...]                   # (S_v*V, 2*S_t*T) bf16 (or f32)
    w_txt = wtxt_ref[...]                   # (S_t*T, S_t*T)   bf16 (or f32)
    sseg2 = sseg2_ref[...]                  # (2*S_t*T, 2*S_t) block-diag seg-sum
    bcast2 = bcast2_ref[...]                # (2*S_t, 2*S_t*T) block-diag bcast (gamma folded)
    gemm_dt = w_vis.dtype

    # Entire visual path (seq projection + gate-visual-half + W_v) = ONE GEMM.
    z = jnp.dot(vis_ref[...].astype(gemm_dt), w_vis,
                preferred_element_type=jnp.float32)              # (Bb, 2*S_t*T)
    z = z + misc_ref[0:1, :]                                     # fused biases

    gate_pre = z[:, :n_wide] + jnp.dot(txt.astype(gemm_dt), w_txt,
                                       preferred_element_type=jnp.float32)
    h_m = jnp.maximum(gate_pre, 0.0) * z[:, n_wide:]             # relu gate * W_v(v)

    # alpha = min(||txt|| / (||h_m|| + eps) * beta, 1) per (b, t) segment.
    # Single fused segment-sum: [txt^2 | h_m^2] @ blockdiag(sseg, sseg).
    sq = jnp.dot(jnp.concatenate([txt * txt, h_m * h_m], axis=-1), sseg2,
                 preferred_element_type=jnp.float32)             # (Bb, 2*S_t)
    em_norm = jnp.sqrt(sq[:, :s_t])
    hm_norm = jnp.sqrt(sq[:, s_t:])
    hm_norm = jnp.where(hm_norm == 0.0, 1.0, hm_norm)
    alpha = jnp.minimum(em_norm / (hm_norm + EPS) * beta, 1.0)   # (Bb, S_t)
    alpha_w = jnp.dot(alpha, bcast2[0:s_t, 0:n_wide],
                      preferred_element_type=jnp.float32)        # (Bb, S_t*T)

    # Residual add + LayerNorm over each T-wide segment.
    # sum(x) and sum(x*x) in one fused dot; var = E[x^2] - mean^2.
    x = alpha_w * h_m + txt
    stats = jnp.dot(jnp.concatenate([x, x * x], axis=-1), sseg2,
                    preferred_element_type=jnp.float32) * inv_t  # (Bb, 2*S_t)
    mean = stats[:, :s_t]
    var = stats[:, s_t:] - mean * mean
    rstd = jax.lax.rsqrt(var + LN_EPS)                           # EUP rsqrt
    # One fused broadcast: [mean | rstd] -> [mean_wide | rstd_wide * ln_gamma].
    bw = jnp.dot(jnp.concatenate([mean, rstd], axis=-1), bcast2,
                 preferred_element_type=jnp.float32)             # (Bb, 2*S_t*T)

    # TODO(synk): dropout is identity at inference time; no mask applied.
    out_ref[...] = ((x - bw[:, :n_wide]) * bw[:, n_wide:]
                    + misc_ref[1:2, :n_wide]).astype(out_ref.dtype)


# --------------------------------------------------------------------------- #
# Parameter packing (wrapper-side, exact math, tiny tensors)
# --------------------------------------------------------------------------- #
def pack_mag_operands(params, s_t, s_v, *, gemm_dtype=jnp.bfloat16):
    proj_w = params["proj_w"]        # (S_t, S_v)
    proj_b = params["proj_b"]        # (S_t,)
    whv_w = params["whv_w"]          # (T, V+T)
    whv_b = params["whv_b"]          # (T,)
    wv_w = params["wv_w"]            # (T, V)
    wv_b = params["wv_b"]            # (T,)
    ln_g = params["ln_g"]            # (T,)
    ln_b = params["ln_b"]            # (T,)

    t_dim, v_dim = wv_w.shape
    n_wide = s_t * t_dim
    eye_v = jnp.eye(v_dim, dtype=jnp.float32)
    eye_s = jnp.eye(s_t, dtype=jnp.float32)
    hi = jax.lax.Precision.HIGHEST

    # Sequence projection expanded to the flattened (S_v*V) -> (S_t*V) layout.
    w_proj_exp = (proj_w.T[:, None, :, None] *
                  eye_v[None, :, None, :]).reshape(s_v * v_dim, s_t * v_dim)
    pb_wide = jnp.repeat(proj_b, v_dim)                           # (S_t*V,)

    # W_hv (visual half), W_hv (text half), W_v expanded block-diagonally per t.
    whv_v_t = whv_w[:, :v_dim].T                                  # (V, T)
    whv_t_t = whv_w[:, v_dim:].T                                  # (T, T)
    wv_t = wv_w.T                                                 # (V, T)
    whv_v_exp = (eye_s[:, None, :, None] *
                 whv_v_t[None, :, None, :]).reshape(s_t * v_dim, n_wide)
    wv_exp = (eye_s[:, None, :, None] *
              wv_t[None, :, None, :]).reshape(s_t * v_dim, n_wide)
    w_txt_gate = (eye_s[:, None, :, None] *
                  whv_t_t[None, :, None, :]).reshape(n_wide, n_wide)

    # Fuse [gate-visual | W_v] (shared LHS) and fold the projection in:
    # kernel visual path = ONE GEMM with this weight slab.
    w_vcat = jnp.concatenate([whv_v_exp, wv_exp], axis=1)         # (S_t*V, 2*S_t*T)
    w_vis_all = jnp.dot(w_proj_exp, w_vcat, precision=hi)         # (S_v*V, 2*S_t*T)
    b_all = (jnp.dot(pb_wide, w_vcat, precision=hi)
             + jnp.concatenate([jnp.tile(whv_b, s_t), jnp.tile(wv_b, s_t)]))

    # misc row 0: fused biases (gate half | W_v half); row 1: LN beta (| zeros).
    misc = jnp.stack([b_all,
                      jnp.concatenate([jnp.tile(ln_b, s_t),
                                       jnp.zeros((n_wide,), jnp.float32)])])

    # Fused segment-sum / segment-broadcast matrices.
    sseg = jnp.repeat(eye_s, t_dim, axis=0)                       # (S_t*T, S_t)
    sbc = sseg.T                                                  # (S_t, S_t*T)
    sseg2 = jnp.zeros((2 * n_wide, 2 * s_t), jnp.float32)
    sseg2 = sseg2.at[:n_wide, :s_t].set(sseg).at[n_wide:, s_t:].set(sseg)
    gamma_wide = jnp.tile(ln_g, s_t)                              # (S_t*T,)
    bcast2 = jnp.zeros((2 * s_t, 2 * n_wide), jnp.float32)
    bcast2 = bcast2.at[:s_t, :n_wide].set(sbc)
    bcast2 = bcast2.at[s_t:, n_wide:].set(sbc * gamma_wide[None, :])  # ln_gamma folded

    return {"w_vis_all": w_vis_all.astype(gemm_dtype),
            "w_txt_gate": w_txt_gate.astype(gemm_dtype),
            "misc": misc, "sseg2": sseg2, "bcast2": bcast2}


# --------------------------------------------------------------------------- #
# Wrapper
# --------------------------------------------------------------------------- #
def mag_forward(text_embedding, visual, params, beta_shift, *,
                block_b=MAX_BATCH_BLOCK, gemm_dtype=jnp.bfloat16):
    b, s_t, t_dim = text_embedding.shape
    _, s_v, v_dim = visual.shape
    n_wide = s_t * t_dim
    m_wide = s_v * v_dim

    ops = pack_mag_operands(params, s_t, s_v, gemm_dtype=gemm_dtype)

    bb, b_pad = _choose_block(b, block_b)

    # Free HBM reshapes -> lane-dense activations (text/out 256-wide, vis 96-wide).
    txt2 = text_embedding.reshape(b, n_wide)
    vis2 = visual.reshape(b, m_wide)
    if b_pad != b:
        txt2 = jnp.pad(txt2, ((0, b_pad - b), (0, 0)))
        vis2 = jnp.pad(vis2, ((0, b_pad - b), (0, 0)))

    beta_arr = jnp.full((1, 1), beta_shift, jnp.float32)

    out = pl.pallas_call(
        _mag_wide_kernel,
        out_shape=jax.ShapeDtypeStruct((b_pad, n_wide), jnp.float32),
        grid=(b_pad // bb,),
        in_specs=[
            pl.BlockSpec(memory_space=pltpu.MemorySpace.SMEM),        # beta_shift
            pl.BlockSpec((bb, m_wide), lambda i: (i, 0)),             # visual (wide)
            pl.BlockSpec((bb, n_wide), lambda i: (i, 0)),             # text (wide)
            pl.BlockSpec(ops["w_vis_all"].shape, lambda i: (0, 0)),   # fused visual-path W
            pl.BlockSpec(ops["w_txt_gate"].shape, lambda i: (0, 0)),  # gate text W
            pl.BlockSpec(ops["misc"].shape, lambda i: (0, 0)),        # biases + LN beta
            pl.BlockSpec(ops["sseg2"].shape, lambda i: (0, 0)),       # fused segment-sum
            pl.BlockSpec(ops["bcast2"].shape, lambda i: (0, 0)),      # fused broadcast (gamma)
        ],
        out_specs=pl.BlockSpec((bb, n_wide), lambda i: (i, 0)),
        compiler_params=pltpu.CompilerParams(
            dimension_semantics=("parallel",),       # shards batch across v7x's 2 TCs
            vmem_limit_bytes=32 * 1024 * 1024,       # actual use well below this at bb=1024
        ),
    )(beta_arr, vis2, txt2, ops["w_vis_all"], ops["w_txt_gate"],
      ops["misc"], ops["sseg2"], ops["bcast2"])

    if b_pad != b:
        out = out[:b]
    return out.reshape(b, s_t, t_dim)


# --------------------------------------------------------------------------- #
# Parameters + pure-JAX reference (PyTorch semantics)
# --------------------------------------------------------------------------- #
def init_params(key, s_t, s_v):
    """Deterministic synthetic parameters (torch nn.Linear-style uniform init)."""
    ks = jax.random.split(key, 5)

    def linear(k, out_dim, in_dim):
        bound = 1.0 / (in_dim ** 0.5)
        kw, kb = jax.random.split(k)
        w = jax.random.uniform(kw, (out_dim, in_dim), jnp.float32, -bound, bound)
        b = jax.random.uniform(kb, (out_dim,), jnp.float32, -bound, bound)
        return w, b

    # nn.Linear(visual.shape[1], text_embedding.shape[1]) created inside forward()
    # (random every call in PyTorch) -> fixed deterministically here.
    proj_w, proj_b = linear(ks[0], s_t, s_v)
    whv_w, whv_b = linear(ks[1], TEXT_DIM, VISUAL_DIM + TEXT_DIM)
    wv_w, wv_b = linear(ks[2], TEXT_DIM, VISUAL_DIM)

    # Non-trivial LayerNorm affine so the gamma-folding path is exercised.
    ln_g = 1.0 + 0.1 * jax.random.normal(ks[3], (TEXT_DIM,), jnp.float32)
    ln_b = 0.05 * jax.random.normal(ks[4], (TEXT_DIM,), jnp.float32)

    return {
        "proj_w": proj_w, "proj_b": proj_b,
        "whv_w": whv_w, "whv_b": whv_b,
        "wv_w": wv_w, "wv_b": wv_b,
        "ln_g": ln_g, "ln_b": ln_b,
    }


def mag_reference(text_embedding, visual, params, beta_shift):
    """Pure-JAX reference matching the PyTorch forward semantics."""
    vp = (jnp.einsum("bsv,ts->btv", visual, params["proj_w"])
          + params["proj_b"][None, :, None])                              # (B, S_t, V)
    fused_in = jnp.concatenate([vp, text_embedding], axis=-1)
    gate = jax.nn.relu(fused_in @ params["whv_w"].T + params["whv_b"])
    h_m = gate * (vp @ params["wv_w"].T + params["wv_b"])
    em_norm = jnp.linalg.norm(text_embedding, axis=-1)
    hm_norm = jnp.linalg.norm(h_m, axis=-1)
    hm_norm = jnp.where(hm_norm == 0.0, 1.0, hm_norm)
    alpha = jnp.minimum(em_norm / (hm_norm + EPS) * beta_shift, 1.0)[..., None]
    x = alpha * h_m + text_embedding
    mean = x.mean(-1, keepdims=True)
    var = ((x - mean) ** 2).mean(-1, keepdims=True)
    return (x - mean) / jnp.sqrt(var + LN_EPS) * params["ln_g"] + params["ln_b"]


if __name__ == "__main__":
    key = jax.random.PRNGKey(0)
    k_txt, k_vis, k_par = jax.random.split(key, 3)

    B, S_t, S_v = 2, 8, 6
    beta_shift = 0.5

    text = jax.random.normal(k_txt, (B, S_t, TEXT_DIM), jnp.float32)
    visual = jax.random.normal(k_vis, (B, S_v, VISUAL_DIM), jnp.float32)
    params = init_params(k_par, S_t, S_v)

    ref = mag_reference(text, visual, params, beta_shift)

    # Exact-math path (f32 GEMMs) — tight check against the reference.
    out_f32 = mag_forward(text, visual, params, beta_shift, gemm_dtype=jnp.float32)
    jax.block_until_ready(out_f32)
    err_f32 = float(jnp.max(jnp.abs(out_f32 - ref)))
    assert err_f32 < 5e-4, f"f32 mismatch vs reference: {err_f32}"

    # Fast path (bf16 MXU GEMMs, f32 accumulation / norms / LayerNorm).
    out_bf16 = mag_forward(text, visual, params, beta_shift, gemm_dtype=jnp.bfloat16)
    jax.block_until_ready(out_bf16)
    err_bf16 = float(jnp.max(jnp.abs(out_bf16 - ref)))
    assert err_bf16 < 5e-2, f"bf16 mismatch vs reference: {err_bf16}"

    print("KERNEL_OK")
</pallas_src>

<mosaic_0001>
module attributes {stable_mosaic.version = 11 : i64} {
  func.func @_mag_wide_kernel(%arg0: i32, %arg1: memref<1x1xf32, #tpu.memory_space<smem>>, %arg2: memref<8x96xf32, #tpu.memory_space<vmem>>, %arg3: memref<8x256xf32, #tpu.memory_space<vmem>>, %arg4: memref<96x512xf32, #tpu.memory_space<vmem>>, %arg5: memref<256x256xf32, #tpu.memory_space<vmem>>, %arg6: memref<2x512xf32, #tpu.memory_space<vmem>>, %arg7: memref<512x16xf32, #tpu.memory_space<vmem>>, %arg8: memref<16x512xf32, #tpu.memory_space<vmem>>, %arg9: memref<8x256xf32, #tpu.memory_space<vmem>>) attributes {dimension_semantics = [#tpu.dimension_semantics<parallel>], iteration_bounds = array<i64: 1>, scalar_prefetch = 0 : i64, scratch_operands = 0 : i64, tpu.core_type = #tpu.core_type<tc>, window_params = [{transform_indices = @transform_0, window_bounds = array<i64: 1, 1>}, {transform_indices = @transform_1, window_bounds = array<i64: 8, 96>}, {transform_indices = @transform_2, window_bounds = array<i64: 8, 256>}, {pipeline_mode = #tpu.pipeline_mode<synchronous>, transform_indices = @transform_3, window_bounds = array<i64: 96, 512>}, {pipeline_mode = #tpu.pipeline_mode<synchronous>, transform_indices = @transform_4, window_bounds = array<i64: 256, 256>}, {pipeline_mode = #tpu.pipeline_mode<synchronous>, transform_indices = @transform_5, window_bounds = array<i64: 2, 512>}, {pipeline_mode = #tpu.pipeline_mode<synchronous>, transform_indices = @transform_6, window_bounds = array<i64: 512, 16>}, {pipeline_mode = #tpu.pipeline_mode<synchronous>, transform_indices = @transform_7, window_bounds = array<i64: 16, 512>}, {transform_indices = @transform_8, window_bounds = array<i64: 8, 256>}]} {
    %c0 = arith.constant 0 : index
    %c0_0 = arith.constant 0 : index
    %0 = memref.load %arg1[%c0, %c0_0] : memref<1x1xf32, #tpu.memory_space<smem>>
    %c0_1 = arith.constant 0 : index
    %c0_2 = arith.constant 0 : index
    %1 = vector.load %arg3[%c0_1, %c0_2] : memref<8x256xf32, #tpu.memory_space<vmem>>, vector<8x256xf32>
    %c0_3 = arith.constant 0 : index
    %c0_4 = arith.constant 0 : index
    %2 = vector.load %arg4[%c0_3, %c0_4] : memref<96x512xf32, #tpu.memory_space<vmem>>, vector<96x512xf32>
    %c0_5 = arith.constant 0 : index
    %c0_6 = arith.constant 0 : index
    %3 = vector.load %arg5[%c0_5, %c0_6] : memref<256x256xf32, #tpu.memory_space<vmem>>, vector<256x256xf32>
    %c0_7 = arith.constant 0 : index
    %c0_8 = arith.constant 0 : index
    %4 = vector.load %arg7[%c0_7, %c0_8] : memref<512x16xf32, #tpu.memory_space<vmem>>, vector<512x16xf32>
    %c0_9 = arith.constant 0 : index
    %c0_10 = arith.constant 0 : index
    %5 = vector.load %arg8[%c0_9, %c0_10] : memref<16x512xf32, #tpu.memory_space<vmem>>, vector<16x512xf32>
    %c0_11 = arith.constant 0 : index
    %c0_12 = arith.constant 0 : index
    %6 = vector.load %arg2[%c0_11, %c0_12] : memref<8x96xf32, #tpu.memory_space<vmem>>, vector<8x96xf32>
    %cst = arith.constant dense<0.000000e+00> : vector<8x512xf32>
    %7 = tpu.matmul %6, %2, %cst {dimension_numbers = #tpu.dot_dimension_numbers<[1], [0], [0], [1], [0, 0, 1, 1], [], []>} : vector<8x96xf32>, vector<96x512xf32>, vector<8x512xf32> -> vector<8x512xf32>
    %c0_13 = arith.constant 0 : index
    %c0_14 = arith.constant 0 : index
    %8 = vector.load %arg6[%c0_13, %c0_14] : memref<2x512xf32, #tpu.memory_space<vmem>>, vector<1x512xf32>
    %9 = vector.broadcast %8 : vector<1x512xf32> to vector<8x512xf32>
    %10 = arith.addf %7, %9 : vector<8x512xf32>
    %11 = vector.extract_strided_slice %10 {offsets = [0, 0], sizes = [8, 256], strides = [1, 1]} : vector<8x512xf32> to vector<8x256xf32>
    %cst_15 = arith.constant dense<0.000000e+00> : vector<8x256xf32>
    %12 = tpu.matmul %1, %3, %cst_15 {dimension_numbers = #tpu.dot_dimension_numbers<[1], [0], [0], [1], [0, 0, 1, 1], [], []>} : vector<8x256xf32>, vector<256x256xf32>, vector<8x256xf32> -> vector<8x256xf32>
    %13 = arith.addf %11, %12 : vector<8x256xf32>
    %cst_16 = arith.constant 0.000000e+00 : f32
    %14 = vector.broadcast %cst_16 : f32 to vector<8x256xf32>
    %15 = arith.maximumf %13, %14 : vector<8x256xf32>
    %16 = vector.extract_strided_slice %10 {offsets = [0, 256], sizes = [8, 256], strides = [1, 1]} : vector<8x512xf32> to vector<8x256xf32>
    %17 = arith.mulf %15, %16 : vector<8x256xf32>
    %18 = arith.mulf %1, %1 : vector<8x256xf32>
    %19 = arith.mulf %17, %17 : vector<8x256xf32>
    %20 = tpu.concatenate %18, %19 in 1 : vector<8x256xf32>, vector<8x256xf32> -> vector<8x512xf32>
    %cst_17 = arith.constant dense<0.000000e+00> : vector<8x16xf32>
    %21 = tpu.matmul %20, %4, %cst_17 {dimension_numbers = #tpu.dot_dimension_numbers<[1], [0], [0], [1], [0, 0, 1, 1], [], []>} : vector<8x512xf32>, vector<512x16xf32>, vector<8x16xf32> -> vector<8x16xf32>
    %22 = vector.extract_strided_slice %21 {offsets = [0, 0], sizes = [8, 8], strides = [1, 1]} : vector<8x16xf32> to vector<8x8xf32>
    %23 = math.sqrt %22 : vector<8x8xf32>
    %24 = vector.extract_strided_slice %21 {offsets = [0, 8], sizes = [8, 8], strides = [1, 1]} : vector<8x16xf32> to vector<8x8xf32>
    %25 = math.sqrt %24 : vector<8x8xf32>
    %cst_18 = arith.constant 0.000000e+00 : f32
    %26 = vector.broadcast %cst_18 : f32 to vector<8x8xf32>
    %27 = arith.cmpf oeq, %25, %26 : vector<8x8xf32>
    %cst_19 = arith.constant 1.000000e+00 : f32
    %28 = vector.broadcast %cst_19 : f32 to vector<8x8xf32>
    %29 = arith.select %27, %28, %25 : vector<8x8xi1>, vector<8x8xf32>
    %cst_20 = arith.constant 9.99999997E-7 : f32
    %30 = vector.broadcast %cst_20 : f32 to vector<8x8xf32>
    %31 = arith.addf %29, %30 : vector<8x8xf32>
    %32 = arith.divf %23, %31 : vector<8x8xf32>
    %33 = vector.broadcast %0 : f32 to vector<8x8xf32>
    %34 = arith.mulf %32, %33 : vector<8x8xf32>
    %cst_21 = arith.constant 1.000000e+00 : f32
    %35 = vector.broadcast %cst_21 : f32 to vector<8x8xf32>
    %36 = arith.minimumf %34, %35 : vector<8x8xf32>
    %37 = vector.extract_strided_slice %5 {offsets = [0, 0], sizes = [8, 256], strides = [1, 1]} : vector<16x512xf32> to vector<8x256xf32>
    %cst_22 = arith.constant dense<0.000000e+00> : vector<8x256xf32>
    %38 = tpu.matmul %36, %37, %cst_22 {dimension_numbers = #tpu.dot_dimension_numbers<[1], [0], [0], [1], [0, 0, 1, 1], [], []>} : vector<8x8xf32>, vector<8x256xf32>, vector<8x256xf32> -> vector<8x256xf32>
    %39 = arith.mulf %38, %17 : vector<8x256xf32>
    %40 = arith.addf %39, %1 : vector<8x256xf32>
    %41 = arith.mulf %40, %40 : vector<8x256xf32>
    %42 = tpu.concatenate %40, %41 in 1 : vector<8x256xf32>, vector<8x256xf32> -> vector<8x512xf32>
    %cst_23 = arith.constant dense<0.000000e+00> : vector<8x16xf32>
    %43 = tpu.matmul %42, %4, %cst_23 {dimension_numbers = #tpu.dot_dimension_numbers<[1], [0], [0], [1], [0, 0, 1, 1], [], []>} : vector<8x512xf32>, vector<512x16xf32>, vector<8x16xf32> -> vector<8x16xf32>
    %cst_24 = arith.constant 3.125000e-02 : f32
    %44 = vector.broadcast %cst_24 : f32 to vector<8x16xf32>
    %45 = arith.mulf %43, %44 : vector<8x16xf32>
    %46 = vector.extract_strided_slice %45 {offsets = [0, 0], sizes = [8, 8], strides = [1, 1]} : vector<8x16xf32> to vector<8x8xf32>
    %47 = vector.extract_strided_slice %45 {offsets = [0, 8], sizes = [8, 8], strides = [1, 1]} : vector<8x16xf32> to vector<8x8xf32>
    %48 = arith.mulf %46, %46 : vector<8x8xf32>
    %49 = arith.subf %47, %48 : vector<8x8xf32>
    %cst_25 = arith.constant 9.99999974E-6 : f32
    %50 = vector.broadcast %cst_25 : f32 to vector<8x8xf32>
    %51 = arith.addf %49, %50 : vector<8x8xf32>
    %52 = math.rsqrt %51 : vector<8x8xf32>
    %53 = tpu.concatenate %46, %52 in 1 : vector<8x8xf32>, vector<8x8xf32> -> vector<8x16xf32>
    %cst_26 = arith.constant dense<0.000000e+00> : vector<8x512xf32>
    %54 = tpu.matmul %53, %5, %cst_26 {dimension_numbers = #tpu.dot_dimension_numbers<[1], [0], [0], [1], [0, 0, 1, 1], [], []>} : vector<8x16xf32>, vector<16x512xf32>, vector<8x512xf32> -> vector<8x512xf32>
    %55 = vector.extract_strided_slice %54 {offsets = [0, 0], sizes = [8, 256], strides = [1, 1]} : vector<8x512xf32> to vector<8x256xf32>
    %56 = arith.subf %40, %55 : vector<8x256xf32>
    %57 = vector.extract_strided_slice %54 {offsets = [0, 256], sizes = [8, 256], strides = [1, 1]} : vector<8x512xf32> to vector<8x256xf32>
    %58 = arith.mulf %56, %57 : vector<8x256xf32>
    %c1 = arith.constant 1 : index
    %c0_27 = arith.constant 0 : index
    %59 = vector.load %arg6[%c1, %c0_27] : memref<2x512xf32, #tpu.memory_space<vmem>>, vector<1x256xf32>
    %60 = vector.broadcast %59 : vector<1x256xf32> to vector<8x256xf32>
    %61 = arith.addf %58, %60 : vector<8x256xf32>
    %c0_28 = arith.constant 0 : index
    %c0_29 = arith.constant 0 : index
    %62 = vector.load %arg9[%c0_28, %c0_29] : memref<8x256xf32, #tpu.memory_space<vmem>>, vector<8x256xf32>
    tpu.vector_store %arg9[%c0_28, %c0_29], %61 {strides = array<i32>} : memref<8x256xf32, #tpu.memory_space<vmem>>, vector<8x256xf32>,
    return
  }
  func.func @transform_0(%arg0: i32) -> (i32, i32) {
    %c0_i32 = arith.constant 0 : i32
    %c0_i32_0 = arith.constant 0 : i32
    %c0_i32_1 = arith.constant 0 : i32
    return %c0_i32, %c0_i32_0 : i32, i32
  }
  func.func @transform_1(%arg0: i32) -> (i32, i32) {
    %c0_i32 = arith.constant 0 : i32
    %c0_i32_0 = arith.constant 0 : i32
    return %arg0, %c0_i32 : i32, i32
  }
  func.func @transform_2(%arg0: i32) -> (i32, i32) {
    %c0_i32 = arith.constant 0 : i32
    %c0_i32_0 = arith.constant 0 : i32
    return %arg0, %c0_i32 : i32, i32
  }
  func.func @transform_3(%arg0: i32) -> (i32, i32) {
    %c0_i32 = arith.constant 0 : i32
    %c0_i32_0 = arith.constant 0 : i32
    %c0_i32_1 = arith.constant 0 : i32
    return %c0_i32, %c0_i32_0 : i32, i32
  }
  func.func @transform_4(%arg0: i32) -> (i32, i32) {
    %c0_i32 = arith.constant 0 : i32
    %c0_i32_0 = arith.constant 0 : i32
    %c0_i32_1 = arith.constant 0 : i32
    return %c0_i32, %c0_i32_0 : i32, i32
  }
  func.func @transform_5(%arg0: i32) -> (i32, i32) {
    %c0_i32 = arith.constant 0 : i32
    %c0_i32_0 = arith.constant 0 : i32
    %c0_i32_1 = arith.constant 0 : i32
    return %c0_i32, %c0_i32_0 : i32, i32
  }
  func.func @transform_6(%arg0: i32) -> (i32, i32) {
    %c0_i32 = arith.constant 0 : i32
    %c0_i32_0 = arith.constant 0 : i32
    %c0_i32_1 = arith.constant 0 : i32
    return %c0_i32, %c0_i32_0 : i32, i32
  }
  func.func @transform_7(%arg0: i32) -> (i32, i32) {
    %c0_i32 = arith.constant 0 : i32
    %c0_i32_0 = arith.constant 0 : i32
    %c0_i32_1 = arith.constant 0 : i32
    return %c0_i32, %c0_i32_0 : i32, i32
  }
  func.func @transform_8(%arg0: i32) -> (i32, i32) {
    %c0_i32 = arith.constant 0 : i32
    %c0_i32_0 = arith.constant 0 : i32
    return %arg0, %c0_i32 : i32, i32
  }
}

</mosaic_0001>

<llo_original>
// kernel: tpu_custom_call.1
$region0: #{tpu_custom_call.1}
  #allocation0 [shape = 'u32[]', space=smem, size = 0x4, offset = 0x4, fixed_abs, tag = 'smem constant byte address 0x4 - core index']
  #allocation1 [shape = 'u32[144,128]{1,0:T(1,128)}', space=vmem, size = 0x12000, scoped, tag = 'internal scratch']
  #allocation2 [shape = 'f32[1,1]{1,0:T(1,128)S(6)}', space=smem, size = 0x200, scoped, tag = 'scoped memory for tpu_custom_call.1']
  %s0 = inlined_call_operand.<no memory space> [shape: f32[1,1], index: 0, kind: input, shape index: {}]
  %s1 = inlined_call_operand.hbm [shape: f32[8,96], index: 1, kind: input, shape index: {}]
  %s2 = inlined_call_operand.hbm [shape: f32[8,256], index: 2, kind: input, shape index: {}]
  %s3 = inlined_call_operand.hbm [shape: f32[96,512], index: 3, kind: input, shape index: {}]
  %s4 = inlined_call_operand.vmem [shape: f32[256,256], index: 4, kind: input, shape index: {}]
  %s5 = inlined_call_operand.hbm [shape: f32[2,512], index: 5, kind: input, shape index: {}]
  %s6 = inlined_call_operand.vmem [shape: f32[512,16], index: 6, kind: input, shape index: {}]
  %s7 = inlined_call_operand.vmem [shape: f32[16,512], index: 7, kind: input, shape index: {}]
  %s8 = inlined_call_operand.hbm [shape: f32[8,256], index: 8, kind: output, shape index: {}]
  %s9 = sld [smem:[#allocation0]]
  $region58: #{tpu_custom_call.1} parent=0
    _
  %s11 = ssub.s32 1, %s9
  %s12 = scalar_select 0, %s11, %s9
  %13 = sst [smem:[#allocation2]] %s0
  $region1: #{tpu_custom_call.1} parent=0
    #allocation3 [shape = 'u8[4096]{0}', space=vmem, size = 0x1000, scoped, tag = 'input window, operand 1, single buffered']
    #allocation4 [shape = 's32[1]{0}', space=sflag, size = 0x4, scoped, tag = 'scoped memory for tpu_custom_call.1']
    #allocation5 [shape = 's32[1]{0}', space=sflag, size = 0x4, scoped, tag = 'scoped memory for tpu_custom_call.1']
    #allocation6 [shape = 'u8[8192]{0}', space=vmem, size = 0x2000, scoped, tag = 'input window, operand 2, single buffered']
    #allocation7 [shape = 's32[1]{0}', space=sflag, size = 0x4, scoped, tag = 'scoped memory for tpu_custom_call.1']
    #allocation8 [shape = 'u8[196608]{0}', space=vmem, size = 0x30000, scoped, tag = 'input window, operand 3, single buffered']
    #allocation9 [shape = 'u8[4096]{0}', space=vmem, size = 0x1000, scoped, tag = 'input window, operand 5, single buffered']
    #allocation10 [shape = 's32[1]{0}', space=sflag, size = 0x4, scoped, tag = 'scoped memory for tpu_custom_call.1']
    #allocation11 [shape = 'u8[8192]{0}', space=vmem, size = 0x2000, scoped, tag = 'output window, operand 0, single buffered']
    %14 = vsyncpa [#allocation4], 0
    %15 = vsyncpa [#allocation7], 0
    %16 = vsyncpa [#allocation10], 0
    %17 = vsyncpa [#allocation5], 0
    // Predicated region
    $region2: #{tpu_custom_call.1} parent=1 // pred_check
      _
    $region3: #{tpu_custom_call.1} parent=1 // pred_check_branch
      %19 = sbr.rel (0) target = $region5
    $region4: #{tpu_custom_call.1} parent=1 // pred_region
      _
    $region5: #{tpu_custom_call.1} parent=1 // pred_fallthru
      _
    // Predicated region
    $region6: #{tpu_custom_call.1} parent=1 // pred_check
      _
    $region7: #{tpu_custom_call.1} parent=1 // pred_check_branch
      %21 = sbr.rel (0) target = $region9
    $region8: #{tpu_custom_call.1} parent=1 // pred_region
      %s23 = ssub.s32 128, 128
      %24 = vsyncadd [#allocation4], %s23
      %s26 = sshll.u32 [#allocation3], 4
      %s27 = int_to_ptr.vmem [resolvable:$true] %s26
      %29 = dma.hbm_to_vmem [thread:$0]  %s1, 128, %s27, [#allocation4]
    $region9: #{tpu_custom_call.1} parent=1 // pred_fallthru
      _
    // Predicated region
    $region10: #{tpu_custom_call.1} parent=1 // pred_check
      _
    $region11: #{tpu_custom_call.1} parent=1 // pred_check_branch
      %31 = sbr.rel (0) target = $region13
    $region12: #{tpu_custom_call.1} parent=1 // pred_region
      %s33 = ssub.s32 256, 256
      %34 = vsyncadd [#allocation7], %s33
      %s36 = sshll.u32 [#allocation6], 4
      %s37 = int_to_ptr.vmem [resolvable:$true] %s36
      %39 = dma.hbm_to_vmem [thread:$0]  %s2, 256, %s37, [#allocation7]
    $region13: #{tpu_custom_call.1} parent=1 // pred_fallthru
      _
    // Predicated region
    $region14: #{tpu_custom_call.1} parent=1 // pred_check
      _
    $region15: #{tpu_custom_call.1} parent=1 // pred_check_branch
      %41 = sbr.rel (0) target = $region17
    $region16: #{tpu_custom_call.1} parent=1 // pred_region
      %s43 = ssub.s32 6144, 6144
      %44 = vsyncadd [#allocation7], %s43
      %s45 = sshll.u32 [#allocation8], 4
      %s46 = int_to_ptr.vmem [resolvable:$true] %s45
      %51 = dma.hbm_to_vmem [thread:$0]  %s3, 6144, %s46, [#allocation7], 512, 512, 32
    $region17: #{tpu_custom_call.1} parent=1 // pred_fallthru
      _
    // Predicated region
    $region18: #{tpu_custom_call.1} parent=1 // pred_check
      _
    $region19: #{tpu_custom_call.1} parent=1 // pred_check_branch
      %53 = sbr.rel (0) target = $region21
    $region20: #{tpu_custom_call.1} parent=1 // pred_region
      _
    $region21: #{tpu_custom_call.1} parent=1 // pred_fallthru
      _
    // Predicated region
    $region22: #{tpu_custom_call.1} parent=1 // pred_check
      _
    $region23: #{tpu_custom_call.1} parent=1 // pred_check_branch
      %55 = sbr.rel (0) target = $region25
    $region24: #{tpu_custom_call.1} parent=1 // pred_region
      %s57 = ssub.s32 128, 128
      %58 = vsyncadd [#allocation10], %s57
      %s60 = sshll.u32 [#allocation9], 4
      %s61 = int_to_ptr.vmem [resolvable:$true] %s60
      %63 = dma.hbm_to_vmem [thread:$0]  %s5, 128, %s61, [#allocation10]
    $region25: #{tpu_custom_call.1} parent=1 // pred_fallthru
      _
    // Predicated region
    $region26: #{tpu_custom_call.1} parent=1 // pred_check
      _
    $region27: #{tpu_custom_call.1} parent=1 // pred_check_branch
      %65 = sbr.rel (0) target = $region29
    $region28: #{tpu_custom_call.1} parent=1 // pred_region
      _
    $region29: #{tpu_custom_call.1} parent=1 // pred_fallthru
      _
    // Predicated region
    $region30: #{tpu_custom_call.1} parent=1 // pred_check
      _
    $region31: #{tpu_custom_call.1} parent=1 // pred_check_branch
      %67 = sbr.rel (0) target = $region33
    $region32: #{tpu_custom_call.1} parent=1 // pred_region
      _
    $region33: #{tpu_custom_call.1} parent=1 // pred_fallthru
      _
    // Predicated region
    $region34: #{tpu_custom_call.1} parent=1 // pred_check
      _
    $region35: #{tpu_custom_call.1} parent=1 // pred_check_branch
      %69 = sbr.rel (0) target = $region37
    $region36: #{tpu_custom_call.1} parent=1 // pred_region
      %70 = dma.done [#allocation4], 128
    $region37: #{tpu_custom_call.1} parent=1 // pred_fallthru
      _
    // Predicated region
    $region38: #{tpu_custom_call.1} parent=1 // pred_check
      _
    $region39: #{tpu_custom_call.1} parent=1 // pred_check_branch
      %72 = sbr.rel (0) target = $region41
    $region40: #{tpu_custom_call.1} parent=1 // pred_region
      %73 = dma.done [#allocation7], 256
    $region41: #{tpu_custom_call.1} parent=1 // pred_fallthru
      _
    // Predicated region
    $region42: #{tpu_custom_call.1} parent=1 // pred_check
      _
    $region43: #{tpu_custom_call.1} parent=1 // pred_check_branch
      %75 = sbr.rel (0) target = $region45
    $region44: #{tpu_custom_call.1} parent=1 // pred_region
      %76 = dma.done [#allocation7], 6144
    $region45: #{tpu_custom_call.1} parent=1 // pred_fallthru
      _
    // Predicated region
    $region46: #{tpu_custom_call.1} parent=1 // pred_check
      _
    $region47: #{tpu_custom_call.1} parent=1 // pred_check_branch
      %78 = sbr.rel (0) target = $region49
    $region48: #{tpu_custom_call.1} parent=1 // pred_region
      %79 = dma.done [#allocation10], 128
    $region49: #{tpu_custom_call.1} parent=1 // pred_fallthru
      _
    %s80 = sld [smem:[#allocation2]]
    %v81 = vld [vmem:[#allocation6] sm:$0xff]
    %v82 = vld [vmem:[#allocation6 + $0x8] sm:$0xff]
    %v83 = vld [vmem:[#allocation8] sm:$0xff]
    %v84 = vld [vmem:[#allocation8 + $0x8] sm:$0xff]
    %v85 = vld [vmem:[#allocation8 + $0x10] sm:$0xff]
    %v86 = vld [vmem:[#allocation8 + $0x18] sm:$0xff]
    %v87 = vld [vmem:[#allocation8 + $0x20] sm:$0xff]
    %v88 = vld [vmem:[#allocation8 + $0x28] sm:$0xff]
    %v89 = vld [vmem:[#allocation8 + $0x30] sm:$0xff]
    %v90 = vld [vmem:[#allocation8 + $0x38] sm:$0xff]
    %v91 = vld [vmem:[#allocation8 + $0x40] sm:$0xff]
    %v92 = vld [vmem:[#allocation8 + $0x48] sm:$0xff]
    %v93 = vld [vmem:[#allocation8 + $0x50] sm:$0xff]
    %v94 = vld [vmem:[#allocation8 + $0x58] sm:$0xff]
    %v95 = vld [vmem:[#allocation8 + $0x60] sm:$0xff]
    %v96 = vld [vmem:[#allocation8 + $0x68] sm:$0xff]
    %v97 = vld [vmem:[#allocation8 + $0x70] sm:$0xff]
    %v98 = vld [vmem:[#allocation8 + $0x78] sm:$0xff]
    %v99 = vld [vmem:[#allocation8 + $0x80] sm:$0xff]
    %v100 = vld [vmem:[#allocation8 + $0x88] sm:$0xff]
    %v101 = vld [vmem:[#allocation8 + $0x90] sm:$0xff]
    %v102 = vld [vmem:[#allocation8 + $0x98] sm:$0xff]
    %v103 = vld [vmem:[#allocation8 + $0xa0] sm:$0xff]
    %v104 = vld [vmem:[#allocation8 + $0xa8] sm:$0xff]
    %v105 = vld [vmem:[#allocation8 + $0xb0] sm:$0xff]
    %v106 = vld [vmem:[#allocation8 + $0xb8] sm:$0xff]
    %v107 = vld [vmem:[#allocation8 + $0xc0] sm:$0xff]
    %v108 = vld [vmem:[#allocation8 + $0xc8] sm:$0xff]
    %v109 = vld [vmem:[#allocation8 + $0xd0] sm:$0xff]
    %v110 = vld [vmem:[#allocation8 + $0xd8] sm:$0xff]
    %v111 = vld [vmem:[#allocation8 + $0xe0] sm:$0xff]
    %v112 = vld [vmem:[#allocation8 + $0xe8] sm:$0xff]
    %v113 = vld [vmem:[#allocation8 + $0xf0] sm:$0xff]
    %v114 = vld [vmem:[#allocation8 + $0xf8] sm:$0xff]
    %v115 = vld [vmem:[#allocation8 + $0x100] sm:$0xff]
    %v116 = vld [vmem:[#allocation8 + $0x108] sm:$0xff]
    %v117 = vld [vmem:[#allocation8 + $0x110] sm:$0xff]
    %v118 = vld [vmem:[#allocation8 + $0x118] sm:$0xff]
    %v119 = vld [vmem:[#allocation8 + $0x120] sm:$0xff]
    %v120 = vld [vmem:[#allocation8 + $0x128] sm:$0xff]
    %v121 = vld [vmem:[#allocation8 + $0x130] sm:$0xff]
    %v122 = vld [vmem:[#allocation8 + $0x138] sm:$0xff]
    %v123 = vld [vmem:[#allocation8 + $0x140] sm:$0xff]
    %v124 = vld [vmem:[#allocation8 + $0x148] sm:$0xff]
    %v125 = vld [vmem:[#allocation8 + $0x150] sm:$0xff]
    %v126 = vld [vmem:[#allocation8 + $0x158] sm:$0xff]
    %v127 = vld [vmem:[#allocation8 + $0x160] sm:$0xff]
    %v128 = vld [vmem:[#allocation8 + $0x168] sm:$0xff]
    %v129 = vld [vmem:[#allocation8 + $0x170] sm:$0xff]
    %v130 = vld [vmem:[#allocation8 + $0x178] sm:$0xff]
    %v131 = vld [vmem:[%s4] sm:$0xff]
    %v132 = vld [vmem:[%s4 + $0x8] sm:$0xff]
    %v133 = vld [vmem:[%s4 + $0x10] sm:$0xff]
    %v134 = vld [vmem:[%s4 + $0x18] sm:$0xff]
    %v135 = vld [vmem:[%s4 + $0x20] sm:$0xff]
    %v136 = vld [vmem:[%s4 + $0x28] sm:$0xff]
    %v137 = vld [vmem:[%s4 + $0x30] sm:$0xff]
    %v138 = vld [vmem:[%s4 + $0x38] sm:$0xff]
    %v139 = vld [vmem:[%s4 + $0x40] sm:$0xff]
    %v140 = vld [vmem:[%s4 + $0x48] sm:$0xff]
    %v141 = vld [vmem:[%s4 + $0x50] sm:$0xff]
    %v142 = vld [vmem:[%s4 + $0x58] sm:$0xff]
    %v143 = vld [vmem:[%s4 + $0x60] sm:$0xff]
    %v144 = vld [vmem:[%s4 + $0x68] sm:$0xff]
    %v145 = vld [vmem:[%s4 + $0x70] sm:$0xff]
    %v146 = vld [vmem:[%s4 + $0x78] sm:$0xff]
    %v147 = vld [vmem:[%s4 + $0x80] sm:$0xff]
    %v148 = vld [vmem:[%s4 + $0x88] sm:$0xff]
    %v149 = vld [vmem:[%s4 + $0x90] sm:$0xff]
    %v150 = vld [vmem:[%s4 + $0x98] sm:$0xff]
    %v151 = vld [vmem:[%s4 + $0xa0] sm:$0xff]
    %v152 = vld [vmem:[%s4 + $0xa8] sm:$0xff]
    %v153 = vld [vmem:[%s4 + $0xb0] sm:$0xff]
    %v154 = vld [vmem:[%s4 + $0xb8] sm:$0xff]
    %v155 = vld [vmem:[%s4 + $0xc0] sm:$0xff]
    %v156 = vld [vmem:[%s4 + $0xc8] sm:$0xff]
    %v157 = vld [vmem:[%s4 + $0xd0] sm:$0xff]
    %v158 = vld [vmem:[%s4 + $0xd8] sm:$0xff]
    %v159 = vld [vmem:[%s4 + $0xe0] sm:$0xff]
    %v160 = vld [vmem:[%s4 + $0xe8] sm:$0xff]
    %v161 = vld [vmem:[%s4 + $0xf0] sm:$0xff]
    %v162 = vld [vmem:[%s4 + $0xf8] sm:$0xff]
    %v163 = vld [vmem:[%s4 + $0x100] sm:$0xff]
    %v164 = vld [vmem:[%s4 + $0x108] sm:$0xff]
    %v165 = vld [vmem:[%s4 + $0x110] sm:$0xff]
    %v166 = vld [vmem:[%s4 + $0x118] sm:$0xff]
    %v167 = vld [vmem:[%s4 + $0x120] sm:$0xff]
    %v168 = vld [vmem:[%s4 + $0x128] sm:$0xff]
    %v169 = vld [vmem:[%s4 + $0x130] sm:$0xff]
    %v170 = vld [vmem:[%s4 + $0x138] sm:$0xff]
    %v171 = vld [vmem:[%s4 + $0x140] sm:$0xff]
    %v172 = vld [vmem:[%s4 + $0x148] sm:$0xff]
    %v173 = vld [vmem:[%s4 + $0x150] sm:$0xff]
    %v174 = vld [vmem:[%s4 + $0x158] sm:$0xff]
    %v175 = vld [vmem:[%s4 + $0x160] sm:$0xff]
    %v176 = vld [vmem:[%s4 + $0x168] sm:$0xff]
    %v177 = vld [vmem:[%s4 + $0x170] sm:$0xff]
    %v178 = vld [vmem:[%s4 + $0x178] sm:$0xff]
    %v179 = vld [vmem:[%s4 + $0x180] sm:$0xff]
    %v180 = vld [vmem:[%s4 + $0x188] sm:$0xff]
    %v181 = vld [vmem:[%s4 + $0x190] sm:$0xff]
    %v182 = vld [vmem:[%s4 + $0x198] sm:$0xff]
    %v183 = vld [vmem:[%s4 + $0x1a0] sm:$0xff]
    %v184 = vld [vmem:[%s4 + $0x1a8] sm:$0xff]
    %v185 = vld [vmem:[%s4 + $0x1b0] sm:$0xff]
    %v186 = vld [vmem:[%s4 + $0x1b8] sm:$0xff]
    %v187 = vld [vmem:[%s4 + $0x1c0] sm:$0xff]
    %v188 = vld [vmem:[%s4 + $0x1c8] sm:$0xff]
    %v189 = vld [vmem:[%s4 + $0x1d0] sm:$0xff]
    %v190 = vld [vmem:[%s4 + $0x1d8] sm:$0xff]
    %v191 = vld [vmem:[%s4 + $0x1e0] sm:$0xff]
    %v192 = vld [vmem:[%s4 + $0x1e8] sm:$0xff]
    %v193 = vld [vmem:[%s4 + $0x1f0] sm:$0xff]
    %v194 = vld [vmem:[%s4 + $0x1f8] sm:$0xff]
    %v195 = vld [vmem:[%s6] sm:$0xff]
    %v196 = vld [vmem:[%s6 + $0x8] sm:$0xff]
    %v197 = vld [vmem:[%s6 + $0x10] sm:$0xff]
    %v198 = vld [vmem:[%s6 + $0x18] sm:$0xff]
    %v199 = vld [vmem:[%s6 + $0x20] sm:$0xff]
    %v200 = vld [vmem:[%s6 + $0x28] sm:$0xff]
    %v201 = vld [vmem:[%s6 + $0x30] sm:$0xff]
    %v202 = vld [vmem:[%s6 + $0x38] sm:$0xff]
    %v203 = vld [vmem:[%s6 + $0x40] sm:$0xff]
    %v204 = vld [vmem:[%s6 + $0x48] sm:$0xff]
    %v205 = vld [vmem:[%s6 + $0x50] sm:$0xff]
    %v206 = vld [vmem:[%s6 + $0x58] sm:$0xff]
    %v207 = vld [vmem:[%s6 + $0x60] sm:$0xff]
    %v208 = vld [vmem:[%s6 + $0x68] sm:$0xff]
    %v209 = vld [vmem:[%s6 + $0x70] sm:$0xff]
    %v210 = vld [vmem:[%s6 + $0x78] sm:$0xff]
    %v211 = vld [vmem:[%s6 + $0x80] sm:$0xff]
    %v212 = vld [vmem:[%s6 + $0x88] sm:$0xff]
    %v213 = vld [vmem:[%s6 + $0x90] sm:$0xff]
    %v214 = vld [vmem:[%s6 + $0x98] sm:$0xff]
    %v215 = vld [vmem:[%s6 + $0xa0] sm:$0xff]
    %v216 = vld [vmem:[%s6 + $0xa8] sm:$0xff]
    %v217 = vld [vmem:[%s6 + $0xb0] sm:$0xff]
    %v218 = vld [vmem:[%s6 + $0xb8] sm:$0xff]
    %v219 = vld [vmem:[%s6 + $0xc0] sm:$0xff]
    %v220 = vld [vmem:[%s6 + $0xc8] sm:$0xff]
    %v221 = vld [vmem:[%s6 + $0xd0] sm:$0xff]
    %v222 = vld [vmem:[%s6 + $0xd8] sm:$0xff]
    %v223 = vld [vmem:[%s6 + $0xe0] sm:$0xff]
    %v224 = vld [vmem:[%s6 + $0xe8] sm:$0xff]
    %v225 = vld [vmem:[%s6 + $0xf0] sm:$0xff]
    %v226 = vld [vmem:[%s6 + $0xf8] sm:$0xff]
    %v227 = vld [vmem:[%s6 + $0x100] sm:$0xff]
    %v228 = vld [vmem:[%s6 + $0x108] sm:$0xff]
    %v229 = vld [vmem:[%s6 + $0x110] sm:$0xff]
    %v230 = vld [vmem:[%s6 + $0x118] sm:$0xff]
    %v231 = vld [vmem:[%s6 + $0x120] sm:$0xff]
    %v232 = vld [vmem:[%s6 + $0x128] sm:$0xff]
    %v233 = vld [vmem:[%s6 + $0x130] sm:$0xff]
    %v234 = vld [vmem:[%s6 + $0x138] sm:$0xff]
    %v235 = vld [vmem:[%s6 + $0x140] sm:$0xff]
    %v236 = vld [vmem:[%s6 + $0x148] sm:$0xff]
    %v237 = vld [vmem:[%s6 + $0x150] sm:$0xff]
    %v238 = vld [vmem:[%s6 + $0x158] sm:$0xff]
    %v239 = vld [vmem:[%s6 + $0x160] sm:$0xff]
    %v240 = vld [vmem:[%s6 + $0x168] sm:$0xff]
    %v241 = vld [vmem:[%s6 + $0x170] sm:$0xff]
    %v242 = vld [vmem:[%s6 + $0x178] sm:$0xff]
    %v243 = vld [vmem:[%s6 + $0x180] sm:$0xff]
    %v244 = vld [vmem:[%s6 + $0x188] sm:$0xff]
    %v245 = vld [vmem:[%s6 + $0x190] sm:$0xff]
    %v246 = vld [vmem:[%s6 + $0x198] sm:$0xff]
    %v247 = vld [vmem:[%s6 + $0x1a0] sm:$0xff]
    %v248 = vld [vmem:[%s6 + $0x1a8] sm:$0xff]
    %v249 = vld [vmem:[%s6 + $0x1b0] sm:$0xff]
    %v250 = vld [vmem:[%s6 + $0x1b8] sm:$0xff]
    %v251 = vld [vmem:[%s6 + $0x1c0] sm:$0xff]
    %v252 = vld [vmem:[%s6 + $0x1c8] sm:$0xff]
    %v253 = vld [vmem:[%s6 + $0x1d0] sm:$0xff]
    %v254 = vld [vmem:[%s6 + $0x1d8] sm:$0xff]
    %v255 = vld [vmem:[%s6 + $0x1e0] sm:$0xff]
    %v256 = vld [vmem:[%s6 + $0x1e8] sm:$0xff]
    %v257 = vld [vmem:[%s6 + $0x1f0] sm:$0xff]
    %v258 = vld [vmem:[%s6 + $0x1f8] sm:$0xff]
    %v259 = vld [vmem:[%s7] sm:$0xff]
    %v260 = vld [vmem:[%s7 + $0x8] sm:$0xff]
    %v261 = vld [vmem:[%s7 + $0x10] sm:$0xff]
    %v262 = vld [vmem:[%s7 + $0x18] sm:$0xff]
    %v263 = vld [vmem:[%s7 + $0x20] sm:$0xff]
    %v264 = vld [vmem:[%s7 + $0x28] sm:$0xff]
    %v265 = vld [vmem:[%s7 + $0x30] sm:$0xff]
    %v266 = vld [vmem:[%s7 + $0x38] sm:$0xff]
    %v267 = vld [vmem:[#allocation3] sm:$0xff]
    %v268 = vld [vmem:[#allocation9] ss:$2 sm:$0xf]
    %v270 = vlaneseq
    %v271 = vshrl.u32 %v270, 7
    %v272 = vsub.s32 0, %v271
    %v273 = vrot.slane %v268, %v272
    %v274 = vlaneseq
    %v275 = vshrl.u32 %v274, 7
    %v276 = vsub.s32 1, %v275
    %v277 = vrot.slane %v268, %v276
    %v278 = vlaneseq
    %v279 = vshrl.u32 %v278, 7
    %v280 = vsub.s32 2, %v279
    %v281 = vrot.slane %v268, %v280
    %v282 = vlaneseq
    %v283 = vshrl.u32 %v282, 7
    %v284 = vsub.s32 3, %v283
    %v285 = vrot.slane %v268, %v284
    %vm290 = vcmask 785408
    %v292 = vsel %vm290, %v267, 0
    %294 = vmatprep.subr.mxu0 0.0
    %295 = vmatpush1.msra.mxu0 0.0
    %296 = vmatprep.subr.mxu0 0.0
    %297 = vmatpush1.msra.mxu0 0.0
    %298 = vmatprep.subr.mxu0 0.0
    %299 = vmatpush1.msra.mxu0 0.0
    %300 = vmatprep.subr.mxu0 0.0
    %301 = vmatpush1.msra.mxu0 0.0
    %302 = vmatprep.subr.mxu0 %v128
    %303 = vmatpush1.msra.mxu0 %v127
    %304 = vmatprep.subr.mxu0 %v124
    %305 = vmatpush1.msra.mxu0 %v123
    %306 = vmatprep.subr.mxu0 %v120
    %307 = vmatpush1.msra.mxu0 %v119
    %308 = vmatprep.subr.mxu0 %v116
    %309 = vmatpush1.msra.mxu0 %v115
    %310 = vmatprep.subr.mxu0 %v112
    %311 = vmatpush1.msra.mxu0 %v111
    %312 = vmatprep.subr.mxu0 %v108
    %313 = vmatpush1.msra.mxu0 %v107
    %314 = vmatprep.subr.mxu0 %v104
    %315 = vmatpush1.msra.mxu0 %v103
    %316 = vmatprep.subr.mxu0 %v100
    %317 = vmatpush1.msra.mxu0 %v99
    %318 = vmatprep.subr.mxu0 %v96
    %319 = vmatpush1.msra.mxu0 %v95
    %320 = vmatprep.subr.mxu0 %v92
    %321 = vmatpush1.msra.mxu0 %v91
    %322 = vmatprep.subr.mxu0 %v88
    %323 = vmatpush1.msra.mxu0 %v87
    %324 = vmatprep.subr.mxu0 %v84
    %325 = vmatpush1.msra.mxu0 %v83
    %326 = vmatprep.subr.mxu0 0.0
    %327 = vmatpush2.msra.mxu0 0.0
    %328 = vmatprep.subr.mxu0 0.0
    %329 = vmatpush2.msra.mxu0 0.0
    %330 = vmatprep.subr.mxu0 0.0
    %331 = vmatpush2.msra.mxu0 0.0
    %332 = vmatprep.subr.mxu0 0.0
    %333 = vmatpush2.msra.mxu0 0.0
    %334 = vmatprep.subr.mxu0 0.0
    %335 = vmatpush2.msra.mxu0 0.0
    %336 = vmatprep.subr.mxu0 0.0
    %337 = vmatpush2.msra.mxu0 0.0
    %338 = vmatprep.subr.mxu0 0.0
    %339 = vmatpush2.msra.mxu0 0.0
    %340 = vmatprep.subr.mxu0 0.0
    %341 = vmatpush2.msra.mxu0 0.0
    %342 = vmatprep.subr.mxu0 0.0
    %343 = vmatpush2.msra.mxu0 0.0
    %344 = vmatprep.subr.mxu0 0.0
    %345 = vmatpush2.msra.mxu0 0.0
    %346 = vmatprep.subr.mxu0 0.0
    %347 = vmatpush2.msra.mxu0 0.0
    %348 = vmatprep.subr.mxu0 0.0
    %349 = vmatpush2.msra.mxu0 0.0
    %350 = vmatprep.subr.mxu0 0.0
    %351 = vmatpush2.msra.mxu0 0.0
    %352 = vmatprep.subr.mxu0 0.0
    %353 = vmatpush2.msra.mxu0 0.0
    %354 = vmatprep.subr.mxu0 0.0
    %355 = vmatpush2.msra.mxu0 0.0
    %356 = vmatprep.subr.mxu0 0.0
    %357 = vmatpush2.msra.mxu0 0.0
    %358 = vmatprep.mubr.f32.mxu0 0.0
    %359 = vmatmul.mubr.f32.gmra.mxu0 %v292
    %v360 = vpop.f32.mrf.mxu0
    %v361 = vadd.f32 %v273, %v360
    %v362 = vpop.f32.mrf.mxu0
    %v363 = vadd.f32 %v277, %v362
    %364 = vdwg.mxu0
    %365 = vmatprep.subr.mxu0 0.0
    %366 = vmatpush1.msra.mxu0 0.0
    %367 = vmatprep.subr.mxu0 0.0
    %368 = vmatpush1.msra.mxu0 0.0
    %369 = vmatprep.subr.mxu0 0.0
    %370 = vmatpush1.msra.mxu0 0.0
    %371 = vmatprep.subr.mxu0 0.0
    %372 = vmatpush1.msra.mxu0 0.0
    %373 = vmatprep.subr.mxu0 %v130
    %374 = vmatpush1.msra.mxu0 %v129
    %375 = vmatprep.subr.mxu0 %v126
    %376 = vmatpush1.msra.mxu0 %v125
    %377 = vmatprep.subr.mxu0 %v122
    %378 = vmatpush1.msra.mxu0 %v121
    %379 = vmatprep.subr.mxu0 %v118
    %380 = vmatpush1.msra.mxu0 %v117
    %381 = vmatprep.subr.mxu0 %v114
    %382 = vmatpush1.msra.mxu0 %v113
    %383 = vmatprep.subr.mxu0 %v110
    %384 = vmatpush1.msra.mxu0 %v109
    %385 = vmatprep.subr.mxu0 %v106
    %386 = vmatpush1.msra.mxu0 %v105
    %387 = vmatprep.subr.mxu0 %v102
    %388 = vmatpush1.msra.mxu0 %v101
    %389 = vmatprep.subr.mxu0 %v98
    %390 = vmatpush1.msra.mxu0 %v97
    %391 = vmatprep.subr.mxu0 %v94
    %392 = vmatpush1.msra.mxu0 %v93
    %393 = vmatprep.subr.mxu0 %v90
    %394 = vmatpush1.msra.mxu0 %v89
    %395 = vmatprep.subr.mxu0 %v86
    %396 = vmatpush1.msra.mxu0 %v85
    %397 = vmatprep.subr.mxu0 0.0
    %398 = vmatpush2.msra.mxu0 0.0
    %399 = vmatprep.subr.mxu0 0.0
    %400 = vmatpush2.msra.mxu0 0.0
    %401 = vmatprep.subr.mxu0 0.0
    %402 = vmatpush2.msra.mxu0 0.0
    %403 = vmatprep.subr.mxu0 0.0
    %404 = vmatpush2.msra.mxu0 0.0
    %405 = vmatprep.subr.mxu0 0.0
    %406 = vmatpush2.msra.mxu0 0.0
    %407 = vmatprep.subr.mxu0 0.0
    %408 = vmatpush2.msra.mxu0 0.0
    %409 = vmatprep.subr.mxu0 0.0
    %410 = vmatpush2.msra.mxu0 0.0
    %411 = vmatprep.subr.mxu0 0.0
    %412 = vmatpush2.msra.mxu0 0.0
    %413 = vmatprep.subr.mxu0 0.0
    %414 = vmatpush2.msra.mxu0 0.0
    %415 = vmatprep.subr.mxu0 0.0
    %416 = vmatpush2.msra.mxu0 0.0
    %417 = vmatprep.subr.mxu0 0.0
    %418 = vmatpush2.msra.mxu0 0.0
    %419 = vmatprep.subr.mxu0 0.0
    %420 = vmatpush2.msra.mxu0 0.0
    %421 = vmatprep.subr.mxu0 0.0
    %422 = vmatpush2.msra.mxu0 0.0
    %423 = vmatprep.subr.mxu0 0.0
    %424 = vmatpush2.msra.mxu0 0.0
    %425 = vmatprep.subr.mxu0 0.0
    %426 = vmatpush2.msra.mxu0 0.0
    %427 = vmatprep.subr.mxu0 0.0
    %428 = vmatpush2.msra.mxu0 0.0
    %429 = vmatprep.mubr.f32.mxu0 0.0
    %430 = vmatmul.mubr.f32.gmra.mxu0 %v292
    %v431 = vpop.f32.mrf.mxu0
    %v432 = vadd.f32 %v281, %v431
    %v433 = vpop.f32.mrf.mxu0
    %v434 = vadd.f32 %v285, %v433
    %435 = vdwg.mxu0
    %436 = vmatprep.subr.mxu0 %v162
    %437 = vmatpush1.msra.mxu0 %v161
    %438 = vmatprep.subr.mxu0 %v160
    %439 = vmatpush1.msra.mxu0 %v159
    %440 = vmatprep.subr.mxu0 %v158
    %441 = vmatpush1.msra.mxu0 %v157
    %442 = vmatprep.subr.mxu0 %v156
    %443 = vmatpush1.msra.mxu0 %v155
    %444 = vmatprep.subr.mxu0 %v154
    %445 = vmatpush1.msra.mxu0 %v153
    %446 = vmatprep.subr.mxu0 %v152
    %447 = vmatpush1.msra.mxu0 %v151
    %448 = vmatprep.subr.mxu0 %v150
    %449 = vmatpush1.msra.mxu0 %v149
    %450 = vmatprep.subr.mxu0 %v148
    %451 = vmatpush1.msra.mxu0 %v147
    %452 = vmatprep.subr.mxu0 %v146
    %453 = vmatpush1.msra.mxu0 %v145
    %454 = vmatprep.subr.mxu0 %v144
    %455 = vmatpush1.msra.mxu0 %v143
    %456 = vmatprep.subr.mxu0 %v142
    %457 = vmatpush1.msra.mxu0 %v141
    %458 = vmatprep.subr.mxu0 %v140
    %459 = vmatpush1.msra.mxu0 %v139
    %460 = vmatprep.subr.mxu0 %v138
    %461 = vmatpush1.msra.mxu0 %v137
    %462 = vmatprep.subr.mxu0 %v136
    %463 = vmatpush1.msra.mxu0 %v135
    %464 = vmatprep.subr.mxu0 %v134
    %465 = vmatpush1.msra.mxu0 %v133
    %466 = vmatprep.subr.mxu0 %v132
    %467 = vmatpush1.msra.mxu0 %v131
    %468 = vmatprep.subr.mxu0 %v194
    %469 = vmatpush2.msra.mxu0 %v193
    %470 = vmatprep.subr.mxu0 %v192
    %471 = vmatpush2.msra.mxu0 %v191
    %472 = vmatprep.subr.mxu0 %v190
    %473 = vmatpush2.msra.mxu0 %v189
    %474 = vmatprep.subr.mxu0 %v188
    %475 = vmatpush2.msra.mxu0 %v187
    %476 = vmatprep.subr.mxu0 %v186
    %477 = vmatpush2.msra.mxu0 %v185
    %478 = vmatprep.subr.mxu0 %v184
    %479 = vmatpush2.msra.mxu0 %v183
    %480 = vmatprep.subr.mxu0 %v182
    %481 = vmatpush2.msra.mxu0 %v181
    %482 = vmatprep.subr.mxu0 %v180
    %483 = vmatpush2.msra.mxu0 %v179
    %484 = vmatprep.subr.mxu0 %v178
    %485 = vmatpush2.msra.mxu0 %v177
    %486 = vmatprep.subr.mxu0 %v176
    %487 = vmatpush2.msra.mxu0 %v175
    %488 = vmatprep.subr.mxu0 %v174
    %489 = vmatpush2.msra.mxu0 %v173
    %490 = vmatprep.subr.mxu0 %v172
    %491 = vmatpush2.msra.mxu0 %v171
    %492 = vmatprep.subr.mxu0 %v170
    %493 = vmatpush2.msra.mxu0 %v169
    %494 = vmatprep.subr.mxu0 %v168
    %495 = vmatpush2.msra.mxu0 %v167
    %496 = vmatprep.subr.mxu0 %v166
    %497 = vmatpush2.msra.mxu0 %v165
    %498 = vmatprep.subr.mxu0 %v164
    %499 = vmatpush2.msra.mxu0 %v163
    %500 = vmatprep.mubr.f32.mxu0 %v82
    %501 = vmatmul.mubr.f32.gmra.mxu0 %v81
    %v502 = vpop.f32.mrf.mxu0
    %v503 = vadd.f32 0.0, %v502
    %v504 = vpop.f32.mrf.mxu0
    %v505 = vadd.f32 0.0, %v504
    %506 = vdwg.mxu0
    %v507 = vadd.f32 %v361, %v503
    %v508 = vadd.f32 %v363, %v505
    %v509 = vmax.f32 %v507, 0.0
    %v510 = vmax.f32 %v508, 0.0
    %v511 = vmul.f32 %v509, %v432
    %v512 = vmul.f32 %v510, %v434
    %v513 = vmul.f32 %v81, %v81
    %v514 = vmul.f32 %v82, %v82
    %v515 = vmul.f32 %v511, %v511
    %v516 = vmul.f32 %v512, %v512
    %517 = vmatprep.subr.mxu0 0.0
    %518 = vmatpush1.msra.mxu0 %v210
    %519 = vmatprep.subr.mxu0 0.0
    %520 = vmatpush1.msra.mxu0 %v209
    %521 = vmatprep.subr.mxu0 0.0
    %522 = vmatpush1.msra.mxu0 %v208
    %523 = vmatprep.subr.mxu0 0.0
    %524 = vmatpush1.msra.mxu0 %v207
    %525 = vmatprep.subr.mxu0 0.0
    %526 = vmatpush1.msra.mxu0 %v206
    %527 = vmatprep.subr.mxu0 0.0
    %528 = vmatpush1.msra.mxu0 %v205
    %529 = vmatprep.subr.mxu0 0.0
    %530 = vmatpush1.msra.mxu0 %v204
    %531 = vmatprep.subr.mxu0 0.0
    %532 = vmatpush1.msra.mxu0 %v203
    %533 = vmatprep.subr.mxu0 0.0
    %534 = vmatpush1.msra.mxu0 %v202
    %535 = vmatprep.subr.mxu0 0.0
    %536 = vmatpush1.msra.mxu0 %v201
    %537 = vmatprep.subr.mxu0 0.0
    %538 = vmatpush1.msra.mxu0 %v200
    %539 = vmatprep.subr.mxu0 0.0
    %540 = vmatpush1.msra.mxu0 %v199
    %541 = vmatprep.subr.mxu0 0.0
    %542 = vmatpush1.msra.mxu0 %v198
    %543 = vmatprep.subr.mxu0 0.0
    %544 = vmatpush1.msra.mxu0 %v197
    %545 = vmatprep.subr.mxu0 0.0
    %546 = vmatpush1.msra.mxu0 %v196
    %547 = vmatprep.subr.mxu0 0.0
    %548 = vmatpush1.msra.mxu0 %v195
    %549 = vmatprep.subr.mxu0 0.0
    %550 = vmatpush2.msra.mxu0 %v226
    %551 = vmatprep.subr.mxu0 0.0
    %552 = vmatpush2.msra.mxu0 %v225
    %553 = vmatprep.subr.mxu0 0.0
    %554 = vmatpush2.msra.mxu0 %v224
    %555 = vmatprep.subr.mxu0 0.0
    %556 = vmatpush2.msra.mxu0 %v223
    %557 = vmatprep.subr.mxu0 0.0
    %558 = vmatpush2.msra.mxu0 %v222
    %559 = vmatprep.subr.mxu0 0.0
    %560 = vmatpush2.msra.mxu0 %v221
    %561 = vmatprep.subr.mxu0 0.0
    %562 = vmatpush2.msra.mxu0 %v220
    %563 = vmatprep.subr.mxu0 0.0
    %564 = vmatpush2.msra.mxu0 %v219
    %565 = vmatprep.subr.mxu0 0.0
    %566 = vmatpush2.msra.mxu0 %v218
    %567 = vmatprep.subr.mxu0 0.0
    %568 = vmatpush2.msra.mxu0 %v217
    %569 = vmatprep.subr.mxu0 0.0
    %570 = vmatpush2.msra.mxu0 %v216
    %571 = vmatprep.subr.mxu0 0.0
    %572 = vmatpush2.msra.mxu0 %v215
    %573 = vmatprep.subr.mxu0 0.0
    %574 = vmatpush2.msra.mxu0 %v214
    %575 = vmatprep.subr.mxu0 0.0
    %576 = vmatpush2.msra.mxu0 %v213
    %577 = vmatprep.subr.mxu0 0.0
    %578 = vmatpush2.msra.mxu0 %v212
    %579 = vmatprep.subr.mxu0 0.0
    %580 = vmatpush2.msra.mxu0 %v211
    %581 = vmatprep.mubr.f32.mxu0 %v514
    %582 = vmatmul.mubr.f32.gmra.mxu0 %v513
    %v583 = vpop.f32.mrf.mxu0
    %v584 = vadd.f32 0.0, %v583
    %v585 = vpop.f32.mrf.mxu0
    %586 = vdwg.mxu0
    %587 = vmatprep.subr.mxu0 0.0
    %588 = vmatpush1.msra.mxu0 %v242
    %589 = vmatprep.subr.mxu0 0.0
    %590 = vmatpush1.msra.mxu0 %v241
    %591 = vmatprep.subr.mxu0 0.0
    %592 = vmatpush1.msra.mxu0 %v240
    %593 = vmatprep.subr.mxu0 0.0
    %594 = vmatpush1.msra.mxu0 %v239
    %595 = vmatprep.subr.mxu0 0.0
    %596 = vmatpush1.msra.mxu0 %v238
    %597 = vmatprep.subr.mxu0 0.0
    %598 = vmatpush1.msra.mxu0 %v237
    %599 = vmatprep.subr.mxu0 0.0
    %600 = vmatpush1.msra.mxu0 %v236
    %601 = vmatprep.subr.mxu0 0.0
    %602 = vmatpush1.msra.mxu0 %v235
    %603 = vmatprep.subr.mxu0 0.0
    %604 = vmatpush1.msra.mxu0 %v234
    %605 = vmatprep.subr.mxu0 0.0
    %606 = vmatpush1.msra.mxu0 %v233
    %607 = vmatprep.subr.mxu0 0.0
    %608 = vmatpush1.msra.mxu0 %v232
    %609 = vmatprep.subr.mxu0 0.0
    %610 = vmatpush1.msra.mxu0 %v231
    %611 = vmatprep.subr.mxu0 0.0
    %612 = vmatpush1.msra.mxu0 %v230
    %613 = vmatprep.subr.mxu0 0.0
    %614 = vmatpush1.msra.mxu0 %v229
    %615 = vmatprep.subr.mxu0 0.0
    %616 = vmatpush1.msra.mxu0 %v228
    %617 = vmatprep.subr.mxu0 0.0
    %618 = vmatpush1.msra.mxu0 %v227
    %619 = vmatprep.subr.mxu0 0.0
    %620 = vmatpush2.msra.mxu0 %v258
    %621 = vmatprep.subr.mxu0 0.0
    %622 = vmatpush2.msra.mxu0 %v257
    %623 = vmatprep.subr.mxu0 0.0
    %624 = vmatpush2.msra.mxu0 %v256
    %625 = vmatprep.subr.mxu0 0.0
    %626 = vmatpush2.msra.mxu0 %v255
    %627 = vmatprep.subr.mxu0 0.0
    %628 = vmatpush2.msra.mxu0 %v254
    %629 = vmatprep.subr.mxu0 0.0
    %630 = vmatpush2.msra.mxu0 %v253
    %631 = vmatprep.subr.mxu0 0.0
    %632 = vmatpush2.msra.mxu0 %v252
    %633 = vmatprep.subr.mxu0 0.0
    %634 = vmatpush2.msra.mxu0 %v251
    %635 = vmatprep.subr.mxu0 0.0
    %636 = vmatpush2.msra.mxu0 %v250
    %637 = vmatprep.subr.mxu0 0.0
    %638 = vmatpush2.msra.mxu0 %v249
    %639 = vmatprep.subr.mxu0 0.0
    %640 = vmatpush2.msra.mxu0 %v248
    %641 = vmatprep.subr.mxu0 0.0
    %642 = vmatpush2.msra.mxu0 %v247
    %643 = vmatprep.subr.mxu0 0.0
    %644 = vmatpush2.msra.mxu0 %v246
    %645 = vmatprep.subr.mxu0 0.0
    %646 = vmatpush2.msra.mxu0 %v245
    %647 = vmatprep.subr.mxu0 0.0
    %648 = vmatpush2.msra.mxu0 %v244
    %649 = vmatprep.subr.mxu0 0.0
    %650 = vmatpush2.msra.mxu0 %v243
    %651 = vmatprep.mubr.f32.mxu0 %v516
    %652 = vmatmul.mubr.f32.gmra.mxu0 %v515
    %v653 = vpop.f32.mrf.mxu0
    %v654 = vadd.f32 %v584, %v653
    %v655 = vpop.f32.mrf.mxu0
    %656 = vdwg.mxu0
    %v657 = vrsqrt.pop %v654
    %v658 = vmul.f32 %v654, %v657
    %vm659 = vcmp.eq.f32.partialorder %v654, inf
    %v660 = vsel %vm659, %v654, %v658
    %vm661 = vcmp.eq.f32.partialorder %v654, 0.0
    %v662 = vand.u32 %v654, 2147483648
    %v663 = vsel %vm661, %v662, %v660
    %vm664 = vcmp.eq.f32.partialorder %v663, 0.0
    %v665 = vsel %vm664, 1.0, %v663
    %v666 = vadd.f32 %v665, 1e-06
    %668 = vrot.lane.b32.xlu0 %v666, 120
    %v669 = vpop.permute.xlu0 %668
    %v671 = vrcp.pop %v669
    %v672 = vmul.f32 %v663, %v671
    %v673 = vstv %s80
    %v674 = vmul.f32 %v672, %v673
    %v675 = vmin.f32 %v674, 1.0
    %vm676 = vcmask 64512
    %v678 = vsel %vm676, %v675, 0
    %680 = vmatprep.subr.mxu0 0.0
    %681 = vmatpush1.msra.mxu0 0.0
    %682 = vmatprep.subr.mxu0 0.0
    %683 = vmatpush1.msra.mxu0 0.0
    %684 = vmatprep.subr.mxu0 0.0
    %685 = vmatpush1.msra.mxu0 0.0
    %686 = vmatprep.subr.mxu0 0.0
    %687 = vmatpush1.msra.mxu0 0.0
    %688 = vmatprep.subr.mxu0 0.0
    %689 = vmatpush1.msra.mxu0 0.0
    %690 = vmatprep.subr.mxu0 0.0
    %691 = vmatpush1.msra.mxu0 0.0
    %692 = vmatprep.subr.mxu0 0.0
    %693 = vmatpush1.msra.mxu0 0.0
    %694 = vmatprep.subr.mxu0 0.0
    %695 = vmatpush1.msra.mxu0 0.0
    %696 = vmatprep.subr.mxu0 0.0
    %697 = vmatpush1.msra.mxu0 0.0
    %698 = vmatprep.subr.mxu0 0.0
    %699 = vmatpush1.msra.mxu0 0.0
    %700 = vmatprep.subr.mxu0 0.0
    %701 = vmatpush1.msra.mxu0 0.0
    %702 = vmatprep.subr.mxu0 0.0
    %703 = vmatpush1.msra.mxu0 0.0
    %704 = vmatprep.subr.mxu0 0.0
    %705 = vmatpush1.msra.mxu0 0.0
    %706 = vmatprep.subr.mxu0 0.0
    %707 = vmatpush1.msra.mxu0 0.0
    %708 = vmatprep.subr.mxu0 0.0
    %709 = vmatpush1.msra.mxu0 0.0
    %710 = vmatprep.subr.mxu0 %v260
    %711 = vmatpush1.msra.mxu0 %v259
    %712 = vmatprep.subr.mxu0 0.0
    %713 = vmatpush2.msra.mxu0 0.0
    %714 = vmatprep.subr.mxu0 0.0
    %715 = vmatpush2.msra.mxu0 0.0
    %716 = vmatprep.subr.mxu0 0.0
    %717 = vmatpush2.msra.mxu0 0.0
    %718 = vmatprep.subr.mxu0 0.0
    %719 = vmatpush2.msra.mxu0 0.0
    %720 = vmatprep.subr.mxu0 0.0
    %721 = vmatpush2.msra.mxu0 0.0
    %722 = vmatprep.subr.mxu0 0.0
    %723 = vmatpush2.msra.mxu0 0.0
    %724 = vmatprep.subr.mxu0 0.0
    %725 = vmatpush2.msra.mxu0 0.0
    %726 = vmatprep.subr.mxu0 0.0
    %727 = vmatpush2.msra.mxu0 0.0
    %728 = vmatprep.subr.mxu0 0.0
    %729 = vmatpush2.msra.mxu0 0.0
    %730 = vmatprep.subr.mxu0 0.0
    %731 = vmatpush2.msra.mxu0 0.0
    %732 = vmatprep.subr.mxu0 0.0
    %733 = vmatpush2.msra.mxu0 0.0
    %734 = vmatprep.subr.mxu0 0.0
    %735 = vmatpush2.msra.mxu0 0.0
    %736 = vmatprep.subr.mxu0 0.0
    %737 = vmatpush2.msra.mxu0 0.0
    %738 = vmatprep.subr.mxu0 0.0
    %739 = vmatpush2.msra.mxu0 0.0
    %740 = vmatprep.subr.mxu0 0.0
    %741 = vmatpush2.msra.mxu0 0.0
    %742 = vmatprep.subr.mxu0 0.0
    %743 = vmatpush2.msra.mxu0 0.0
    %744 = vmatprep.mubr.f32.mxu0 0.0
    %745 = vmatmul.mubr.f32.gmra.mxu0 %v678
    %v746 = vpop.f32.mrf.mxu0
    %v747 = vadd.f32 0.0, %v746
    %v748 = vpop.f32.mrf.mxu0
    %v749 = vadd.f32 0.0, %v748
    %750 = vdwg.mxu0
    %v751 = vmul.f32 %v747, %v511
    %v752 = vmul.f32 %v749, %v512
    %v753 = vadd.f32 %v751, %v81
    %v754 = vadd.f32 %v752, %v82
    %v755 = vmul.f32 %v753, %v753
    %v756 = vmul.f32 %v754, %v754
    %757 = vmatprep.subr.mxu0 0.0
    %758 = vmatpush1.msra.mxu0 %v210
    %759 = vmatprep.subr.mxu0 0.0
    %760 = vmatpush1.msra.mxu0 %v209
    %761 = vmatprep.subr.mxu0 0.0
    %762 = vmatpush1.msra.mxu0 %v208
    %763 = vmatprep.subr.mxu0 0.0
    %764 = vmatpush1.msra.mxu0 %v207
    %765 = vmatprep.subr.mxu0 0.0
    %766 = vmatpush1.msra.mxu0 %v206
    %767 = vmatprep.subr.mxu0 0.0
    %768 = vmatpush1.msra.mxu0 %v205
    %769 = vmatprep.subr.mxu0 0.0
    %770 = vmatpush1.msra.mxu0 %v204
    %771 = vmatprep.subr.mxu0 0.0
    %772 = vmatpush1.msra.mxu0 %v203
    %773 = vmatprep.subr.mxu0 0.0
    %774 = vmatpush1.msra.mxu0 %v202
    %775 = vmatprep.subr.mxu0 0.0
    %776 = vmatpush1.msra.mxu0 %v201
    %777 = vmatprep.subr.mxu0 0.0
    %778 = vmatpush1.msra.mxu0 %v200
    %779 = vmatprep.subr.mxu0 0.0
    %780 = vmatpush1.msra.mxu0 %v199
    %781 = vmatprep.subr.mxu0 0.0
    %782 = vmatpush1.msra.mxu0 %v198
    %783 = vmatprep.subr.mxu0 0.0
    %784 = vmatpush1.msra.mxu0 %v197
    %785 = vmatprep.subr.mxu0 0.0
    %786 = vmatpush1.msra.mxu0 %v196
    %787 = vmatprep.subr.mxu0 0.0
    %788 = vmatpush1.msra.mxu0 %v195
    %789 = vmatprep.subr.mxu0 0.0
    %790 = vmatpush2.msra.mxu0 %v226
    %791 = vmatprep.subr.mxu0 0.0
    %792 = vmatpush2.msra.mxu0 %v225
    %793 = vmatprep.subr.mxu0 0.0
    %794 = vmatpush2.msra.mxu0 %v224
    %795 = vmatprep.subr.mxu0 0.0
    %796 = vmatpush2.msra.mxu0 %v223
    %797 = vmatprep.subr.mxu0 0.0
    %798 = vmatpush2.msra.mxu0 %v222
    %799 = vmatprep.subr.mxu0 0.0
    %800 = vmatpush2.msra.mxu0 %v221
    %801 = vmatprep.subr.mxu0 0.0
    %802 = vmatpush2.msra.mxu0 %v220
    %803 = vmatprep.subr.mxu0 0.0
    %804 = vmatpush2.msra.mxu0 %v219
    %805 = vmatprep.subr.mxu0 0.0
    %806 = vmatpush2.msra.mxu0 %v218
    %807 = vmatprep.subr.mxu0 0.0
    %808 = vmatpush2.msra.mxu0 %v217
    %809 = vmatprep.subr.mxu0 0.0
    %810 = vmatpush2.msra.mxu0 %v216
    %811 = vmatprep.subr.mxu0 0.0
    %812 = vmatpush2.msra.mxu0 %v215
    %813 = vmatprep.subr.mxu0 0.0
    %814 = vmatpush2.msra.mxu0 %v214
    %815 = vmatprep.subr.mxu0 0.0
    %816 = vmatpush2.msra.mxu0 %v213
    %817 = vmatprep.subr.mxu0 0.0
    %818 = vmatpush2.msra.mxu0 %v212
    %819 = vmatprep.subr.mxu0 0.0
    %820 = vmatpush2.msra.mxu0 %v211
    %821 = vmatprep.mubr.f32.mxu0 %v754
    %822 = vmatmul.mubr.f32.gmra.mxu0 %v753
    %v823 = vpop.f32.mrf.mxu0
    %v824 = vadd.f32 0.0, %v823
    %v825 = vpop.f32.mrf.mxu0
    %826 = vdwg.mxu0
    %827 = vmatprep.subr.mxu0 0.0
    %828 = vmatpush1.msra.mxu0 %v242
    %829 = vmatprep.subr.mxu0 0.0
    %830 = vmatpush1.msra.mxu0 %v241
    %831 = vmatprep.subr.mxu0 0.0
    %832 = vmatpush1.msra.mxu0 %v240
    %833 = vmatprep.subr.mxu0 0.0
    %834 = vmatpush1.msra.mxu0 %v239
    %835 = vmatprep.subr.mxu0 0.0
    %836 = vmatpush1.msra.mxu0 %v238
    %837 = vmatprep.subr.mxu0 0.0
    %838 = vmatpush1.msra.mxu0 %v237
    %839 = vmatprep.subr.mxu0 0.0
    %840 = vmatpush1.msra.mxu0 %v236
    %841 = vmatprep.subr.mxu0 0.0
    %842 = vmatpush1.msra.mxu0 %v235
    %843 = vmatprep.subr.mxu0 0.0
    %844 = vmatpush1.msra.mxu0 %v234
    %845 = vmatprep.subr.mxu0 0.0
    %846 = vmatpush1.msra.mxu0 %v233
    %847 = vmatprep.subr.mxu0 0.0
    %848 = vmatpush1.msra.mxu0 %v232
    %849 = vmatprep.subr.mxu0 0.0
    %850 = vmatpush1.msra.mxu0 %v231
    %851 = vmatprep.subr.mxu0 0.0
    %852 = vmatpush1.msra.mxu0 %v230
    %853 = vmatprep.subr.mxu0 0.0
    %854 = vmatpush1.msra.mxu0 %v229
    %855 = vmatprep.subr.mxu0 0.0
    %856 = vmatpush1.msra.mxu0 %v228
    %857 = vmatprep.subr.mxu0 0.0
    %858 = vmatpush1.msra.mxu0 %v227
    %859 = vmatprep.subr.mxu0 0.0
    %860 = vmatpush2.msra.mxu0 %v258
    %861 = vmatprep.subr.mxu0 0.0
    %862 = vmatpush2.msra.mxu0 %v257
    %863 = vmatprep.subr.mxu0 0.0
    %864 = vmatpush2.msra.mxu0 %v256
    %865 = vmatprep.subr.mxu0 0.0
    %866 = vmatpush2.msra.mxu0 %v255
    %867 = vmatprep.subr.mxu0 0.0
    %868 = vmatpush2.msra.mxu0 %v254
    %869 = vmatprep.subr.mxu0 0.0
    %870 = vmatpush2.msra.mxu0 %v253
    %871 = vmatprep.subr.mxu0 0.0
    %872 = vmatpush2.msra.mxu0 %v252
    %873 = vmatprep.subr.mxu0 0.0
    %874 = vmatpush2.msra.mxu0 %v251
    %875 = vmatprep.subr.mxu0 0.0
    %876 = vmatpush2.msra.mxu0 %v250
    %877 = vmatprep.subr.mxu0 0.0
    %878 = vmatpush2.msra.mxu0 %v249
    %879 = vmatprep.subr.mxu0 0.0
    %880 = vmatpush2.msra.mxu0 %v248
    %881 = vmatprep.subr.mxu0 0.0
    %882 = vmatpush2.msra.mxu0 %v247
    %883 = vmatprep.subr.mxu0 0.0
    %884 = vmatpush2.msra.mxu0 %v246
    %885 = vmatprep.subr.mxu0 0.0
    %886 = vmatpush2.msra.mxu0 %v245
    %887 = vmatprep.subr.mxu0 0.0
    %888 = vmatpush2.msra.mxu0 %v244
    %889 = vmatprep.subr.mxu0 0.0
    %890 = vmatpush2.msra.mxu0 %v243
    %891 = vmatprep.mubr.f32.mxu0 %v756
    %892 = vmatmul.mubr.f32.gmra.mxu0 %v755
    %v893 = vpop.f32.mrf.mxu0
    %v894 = vadd.f32 %v824, %v893
    %v895 = vpop.f32.mrf.mxu0
    %896 = vdwg.mxu0
    %v897 = vmul.f32 %v894, 0.03125
    %v898 = vmul.f32 %v897, %v897
    %900 = vrot.lane.b32.xlu0 %v898, 8
    %v901 = vpop.permute.xlu0 %900
    %v903 = vsub.f32 %v897, %v901
    %v904 = vadd.f32 %v903, 1e-05
    %v905 = vrsqrt.pop %v904
    %v906 = vsel %vm676, %v897, %v905
    %vm907 = vcmask 130048
    %v909 = vsel %vm907, %v906, 0
    %911 = vmatprep.subr.mxu0 0.0
    %912 = vmatpush1.msra.mxu0 0.0
    %913 = vmatprep.subr.mxu0 0.0
    %914 = vmatpush1.msra.mxu0 0.0
    %915 = vmatprep.subr.mxu0 0.0
    %916 = vmatpush1.msra.mxu0 0.0
    %917 = vmatprep.subr.mxu0 0.0
    %918 = vmatpush1.msra.mxu0 0.0
    %919 = vmatprep.subr.mxu0 0.0
    %920 = vmatpush1.msra.mxu0 0.0
    %921 = vmatprep.subr.mxu0 0.0
    %922 = vmatpush1.msra.mxu0 0.0
    %923 = vmatprep.subr.mxu0 0.0
    %924 = vmatpush1.msra.mxu0 0.0
    %925 = vmatprep.subr.mxu0 0.0
    %926 = vmatpush1.msra.mxu0 0.0
    %927 = vmatprep.subr.mxu0 0.0
    %928 = vmatpush1.msra.mxu0 0.0
    %929 = vmatprep.subr.mxu0 0.0
    %930 = vmatpush1.msra.mxu0 0.0
    %931 = vmatprep.subr.mxu0 0.0
    %932 = vmatpush1.msra.mxu0 0.0
    %933 = vmatprep.subr.mxu0 0.0
    %934 = vmatpush1.msra.mxu0 0.0
    %935 = vmatprep.subr.mxu0 0.0
    %936 = vmatpush1.msra.mxu0 0.0
    %937 = vmatprep.subr.mxu0 0.0
    %938 = vmatpush1.msra.mxu0 0.0
    %939 = vmatprep.subr.mxu0 %v264
    %940 = vmatpush1.msra.mxu0 %v263
    %941 = vmatprep.subr.mxu0 %v260
    %942 = vmatpush1.msra.mxu0 %v259
    %943 = vmatprep.subr.mxu0 0.0
    %944 = vmatpush2.msra.mxu0 0.0
    %945 = vmatprep.subr.mxu0 0.0
    %946 = vmatpush2.msra.mxu0 0.0
    %947 = vmatprep.subr.mxu0 0.0
    %948 = vmatpush2.msra.mxu0 0.0
    %949 = vmatprep.subr.mxu0 0.0
    %950 = vmatpush2.msra.mxu0 0.0
    %951 = vmatprep.subr.mxu0 0.0
    %952 = vmatpush2.msra.mxu0 0.0
    %953 = vmatprep.subr.mxu0 0.0
    %954 = vmatpush2.msra.mxu0 0.0
    %955 = vmatprep.subr.mxu0 0.0
    %956 = vmatpush2.msra.mxu0 0.0
    %957 = vmatprep.subr.mxu0 0.0
    %958 = vmatpush2.msra.mxu0 0.0
    %959 = vmatprep.subr.mxu0 0.0
    %960 = vmatpush2.msra.mxu0 0.0
    %961 = vmatprep.subr.mxu0 0.0
    %962 = vmatpush2.msra.mxu0 0.0
    %963 = vmatprep.subr.mxu0 0.0
    %964 = vmatpush2.msra.mxu0 0.0
    %965 = vmatprep.subr.mxu0 0.0
    %966 = vmatpush2.msra.mxu0 0.0
    %967 = vmatprep.subr.mxu0 0.0
    %968 = vmatpush2.msra.mxu0 0.0
    %969 = vmatprep.subr.mxu0 0.0
    %970 = vmatpush2.msra.mxu0 0.0
    %971 = vmatprep.subr.mxu0 0.0
    %972 = vmatpush2.msra.mxu0 0.0
    %973 = vmatprep.subr.mxu0 0.0
    %974 = vmatpush2.msra.mxu0 0.0
    %975 = vmatprep.mubr.f32.mxu0 0.0
    %976 = vmatmul.mubr.f32.gmra.mxu0 %v909
    %v977 = vpop.f32.mrf.mxu0
    %v978 = vadd.f32 0.0, %v977
    %v979 = vpop.f32.mrf.mxu0
    %v980 = vadd.f32 0.0, %v979
    %981 = vdwg.mxu0
    %982 = vmatprep.subr.mxu0 0.0
    %983 = vmatpush1.msra.mxu0 0.0
    %984 = vmatprep.subr.mxu0 0.0
    %985 = vmatpush1.msra.mxu0 0.0
    %986 = vmatprep.subr.mxu0 0.0
    %987 = vmatpush1.msra.mxu0 0.0
    %988 = vmatprep.subr.mxu0 0.0
    %989 = vmatpush1.msra.mxu0 0.0
    %990 = vmatprep.subr.mxu0 0.0
    %991 = vmatpush1.msra.mxu0 0.0
    %992 = vmatprep.subr.mxu0 0.0
    %993 = vmatpush1.msra.mxu0 0.0
    %994 = vmatprep.subr.mxu0 0.0
    %995 = vmatpush1.msra.mxu0 0.0
    %996 = vmatprep.subr.mxu0 0.0
    %997 = vmatpush1.msra.mxu0 0.0
    %998 = vmatprep.subr.mxu0 0.0
    %999 = vmatpush1.msra.mxu0 0.0
    %1000 = vmatprep.subr.mxu0 0.0
    %1001 = vmatpush1.msra.mxu0 0.0
    %1002 = vmatprep.subr.mxu0 0.0
    %1003 = vmatpush1.msra.mxu0 0.0
    %1004 = vmatprep.subr.mxu0 0.0
    %1005 = vmatpush1.msra.mxu0 0.0
    %1006 = vmatprep.subr.mxu0 0.0
    %1007 = vmatpush1.msra.mxu0 0.0
    %1008 = vmatprep.subr.mxu0 0.0
    %1009 = vmatpush1.msra.mxu0 0.0
    %1010 = vmatprep.subr.mxu0 %v266
    %1011 = vmatpush1.msra.mxu0 %v265
    %1012 = vmatprep.subr.mxu0 %v262
    %1013 = vmatpush1.msra.mxu0 %v261
    %1014 = vmatprep.subr.mxu0 0.0
    %1015 = vmatpush2.msra.mxu0 0.0
    %1016 = vmatprep.subr.mxu0 0.0
    %1017 = vmatpush2.msra.mxu0 0.0
    %1018 = vmatprep.subr.mxu0 0.0
    %1019 = vmatpush2.msra.mxu0 0.0
    %1020 = vmatprep.subr.mxu0 0.0
    %1021 = vmatpush2.msra.mxu0 0.0
    %1022 = vmatprep.subr.mxu0 0.0
    %1023 = vmatpush2.msra.mxu0 0.0
    %1024 = vmatprep.subr.mxu0 0.0
    %1025 = vmatpush2.msra.mxu0 0.0
    %1026 = vmatprep.subr.mxu0 0.0
    %1027 = vmatpush2.msra.mxu0 0.0
    %1028 = vmatprep.subr.mxu0 0.0
    %1029 = vmatpush2.msra.mxu0 0.0
    %1030 = vmatprep.subr.mxu0 0.0
    %1031 = vmatpush2.msra.mxu0 0.0
    %1032 = vmatprep.subr.mxu0 0.0
    %1033 = vmatpush2.msra.mxu0 0.0
    %1034 = vmatprep.subr.mxu0 0.0
    %1035 = vmatpush2.msra.mxu0 0.0
    %1036 = vmatprep.subr.mxu0 0.0
    %1037 = vmatpush2.msra.mxu0 0.0
    %1038 = vmatprep.subr.mxu0 0.0
    %1039 = vmatpush2.msra.mxu0 0.0
    %1040 = vmatprep.subr.mxu0 0.0
    %1041 = vmatpush2.msra.mxu0 0.0
    %1042 = vmatprep.subr.mxu0 0.0
    %1043 = vmatpush2.msra.mxu0 0.0
    %1044 = vmatprep.subr.mxu0 0.0
    %1045 = vmatpush2.msra.mxu0 0.0
    %1046 = vmatprep.mubr.f32.mxu0 0.0
    %1047 = vmatmul.mubr.f32.gmra.mxu0 %v909
    %v1048 = vpop.f32.mrf.mxu0
    %v1049 = vadd.f32 0.0, %v1048
    %v1050 = vpop.f32.mrf.mxu0
    %v1051 = vadd.f32 0.0, %v1050
    %1052 = vdwg.mxu0
    %v1053 = vsub.f32 %v753, %v978
    %v1054 = vsub.f32 %v754, %v980
    %v1055 = vmul.f32 %v1053, %v1049
    %v1056 = vmul.f32 %v1054, %v1051
    %s1057 = scalar_lea.vmem [#allocation9], 1
    %v1058 = vld [vmem:[%s1057] ss:$2 sm:$0x3]
    %v1060 = vlaneseq
    %v1061 = vshrl.u32 %v1060, 7
    %v1062 = vsub.s32 0, %v1061
    %v1063 = vrot.slane %v1058, %v1062
    %v1064 = vlaneseq
    %v1065 = vshrl.u32 %v1064, 7
    %v1066 = vsub.s32 1, %v1065
    %v1067 = vrot.slane %v1058, %v1066
    %v1070 = vadd.f32 %v1055, %v1063
    %v1071 = vadd.f32 %v1056, %v1067
    %1072 = vst [vmem:[#allocation11] sm:$0xff] %v1070
    %1073 = vst [vmem:[#allocation11 + $0x8] sm:$0xff] %v1071
    // Predicated region
    $region50: #{tpu_custom_call.1} parent=1 // pred_check
      _
    $region51: #{tpu_custom_call.1} parent=1 // pred_check_branch
      %1075 = sbr.rel (0) target = $region53
    $region52: #{tpu_custom_call.1} parent=1 // pred_region
      %s1077 = ssub.s32 256, 256
      %1078 = vsyncadd [#allocation5], %s1077
      %s1080 = sshll.u32 [#allocation11], 4
      %s1081 = int_to_ptr.vmem [resolvable:$true] %s1080
      %1083 = dma.vmem_to_hbm [thread:$0]  %s1081, 256, %s8, [#allocation5]
    $region53: #{tpu_custom_call.1} parent=1 // pred_fallthru
      _
    // Predicated region
    $region54: #{tpu_custom_call.1} parent=1 // pred_check
      _
    $region55: #{tpu_custom_call.1} parent=1 // pred_check_branch
      %1085 = sbr.rel (0) target = $region57
    $region56: #{tpu_custom_call.1} parent=1 // pred_region
      %1086 = dma.done [#allocation5], 256
    $region57: #{tpu_custom_call.1} parent=1 // pred_fallthru
      _
    %1087 = vsyncpa [#allocation4], 1
    %1088 = vsyncpa [#allocation7], 1
    %1089 = vsyncpa [#allocation10], 1
    %1090 = vsyncpa [#allocation5], 1

</llo_original>
